<compile_context>
chip_gen: v5e
topology: v5e:2x2
jax: 0.10.0
libtpu: 0.0.40
codegen_flags: <defaults>
</compile_context>

<pallas_src>
import functools

import jax
import jax.numpy as jnp
from jax.experimental import pallas as pl
from jax.experimental.pallas import tpu as pltpu


# --------------------------------------------------------------------------
# Fused LayerNorm + folded stylization + SiLU + output projection.
#   grid = (B, T // tt); one HBM pass over h, lane-dense (.., D) output.
# --------------------------------------------------------------------------
def _fused_kernel(h_ref, eg_ref, eb_ref, w_ref, b_ref, o_ref, *, eps):
    x = h_ref[0].astype(jnp.float32)                       # (tt, D)

    # LayerNorm statistics in a single pass (biased variance, like nn.LayerNorm)
    mean = jnp.mean(x, axis=-1, keepdims=True)
    mean_sq = jnp.mean(x * x, axis=-1, keepdims=True)
    var = mean_sq - mean * mean
    inv = jax.lax.rsqrt(var + eps)

    # Folded affine + stylization:  xn_raw * eff_gamma + eff_beta
    #   (eff_gamma = gamma*(1+scale), eff_beta = beta*(1+scale)+shift, f32)
    y = (x - mean) * inv * eg_ref[0] + eb_ref[0]           # (tt, D)

    # SiLU
    z = y * jax.nn.sigmoid(y)
    # TODO(synk): nn.Dropout(p) is an eval-time no-op here; training-mode
    # dropout would need pltpu.prng_seed / pltpu.prng_random_bits.

    # Output projection; MXU is fed operands in the weight's dtype
    # (bf16 when prepare_params(mxu_dtype=bf16) is used), f32 accumulation.
    acc = jnp.dot(z.astype(w_ref.dtype), w_ref[...],
                  preferred_element_type=jnp.float32)      # (tt, D)
    o_ref[0] = (acc + b_ref[...].astype(jnp.float32)).astype(o_ref.dtype)


# --------------------------------------------------------------------------
# Tile selection: VMEM-budget aware + enough grid steps for 2 TCs (v7x).
# --------------------------------------------------------------------------
def _pick_row_tile(B, T, D, itemsize):
    cands = [t for t in (1024, 512, 256, 128, 64, 32, 16, 8) if T % t == 0]
    if not cands:
        return T  # block == full T is always legal

    budget = 24 << 20  # headroom under the 32 MiB (v6e/v7x) scoped default

    def vmem_est(tt):
        io = 2 * 2 * tt * D * itemsize        # double-buffered h in + out
        temps = 4 * tt * D * 4                # f32 temporaries in the body
        weight = 2 * D * D * itemsize         # (possibly double-buffered) W
        return io + temps + weight

    fitting = [t for t in cands if vmem_est(t) <= budget] or [cands[-1]]
    # Prefer the largest fitting tile that still yields >= 4 total grid steps
    # (keeps both v7x TensorCores fed with pipelining slack).
    for tt in fitting:
        if B * (T // tt) >= 4:
            return tt
    return fitting[-1]


# --------------------------------------------------------------------------
# One-time parameter preparation (hoisted out of the per-call path).
# PyTorch nn.Linear weight is (out_features, in_features); we pre-transpose.
# --------------------------------------------------------------------------
def prepare_params(params, mxu_dtype=None):
    D = params["gamma"].shape[0]
    prepped = {
        "w_emb_t": jnp.transpose(params["w_emb"]),   # (D, 2D)
        "b_emb": params["b_emb"],                    # (2D,)
        "gamma": params["gamma"],                    # (D,)
        "beta": params["beta"],                      # (D,)
        "w_out_t": jnp.transpose(params["w_out"]),   # (D, D)
        "b_out": params["b_out"].reshape(1, D),      # (1, D)
    }
    if mxu_dtype is not None:
        # v6e/v7x: feed the MXU bf16 operands (2-3x MXU throughput, half DMA).
        prepped["w_out_t"] = prepped["w_out_t"].astype(mxu_dtype)
    return prepped


# --------------------------------------------------------------------------
# Full module forward
# --------------------------------------------------------------------------
def stylization_forward(h, emb, prepped, eps=1e-5):
    B, T, D = h.shape
    emb = emb.reshape(B, T, D)            # mirrors torch emb.view(B, T, D)
    # Only time-step 0 survives the [:, 0:1, :] slice -> project only that row.
    emb0 = emb[:, 0, :].astype(jnp.float32)                 # (B, D)

    # Tiny O(B*D^2) projection: one fused (B,D)x(D,2D) matmul, handled by XLA.
    s = emb0 * jax.nn.sigmoid(emb0)                         # SiLU, f32
    emb_out = jnp.dot(s.astype(prepped["w_emb_t"].dtype), prepped["w_emb_t"],
                      preferred_element_type=jnp.float32)
    emb_out = emb_out + prepped["b_emb"].astype(jnp.float32)  # (B, 2D)
    scale, shift = emb_out[:, :D], emb_out[:, D:]

    # Fold the LN affine into per-batch stylization vectors (kept in f32).
    one_plus = 1.0 + scale
    gamma = prepped["gamma"].astype(jnp.float32)
    beta = prepped["beta"].astype(jnp.float32)
    eff_gamma = (gamma[None, :] * one_plus)[:, None, :]           # (B, 1, D)
    eff_beta = (beta[None, :] * one_plus + shift)[:, None, :]     # (B, 1, D)

    w_out_t = prepped["w_out_t"]
    b_out = prepped["b_out"]

    tt = _pick_row_tile(B, T, D, jnp.dtype(h.dtype).itemsize)

    # Grid-invariant operands: single-buffer them when large enough for the
    # VMEM saving to matter (double-buffering a constant block buys nothing).
    w_spec = pl.BlockSpec((D, D), lambda b, t: (0, 0))
    b_spec = pl.BlockSpec((1, D), lambda b, t: (0, 0))
    if D * D * jnp.dtype(w_out_t.dtype).itemsize >= (2 << 20):
        w_spec = pl.BlockSpec((D, D), lambda b, t: (0, 0),
                              pipeline_mode=pl.Buffered(1))
        b_spec = pl.BlockSpec((1, D), lambda b, t: (0, 0),
                              pipeline_mode=pl.Buffered(1))

    kern = functools.partial(_fused_kernel, eps=eps)
    out = pl.pallas_call(
        kern,
        out_shape=jax.ShapeDtypeStruct((B, T, D), h.dtype),
        grid=(B, T // tt),
        in_specs=[
            pl.BlockSpec((1, tt, D), lambda b, t: (b, t, 0)),   # h tile
            pl.BlockSpec((1, 1, D), lambda b, t: (b, 0, 0)),    # eff_gamma (f32)
            pl.BlockSpec((1, 1, D), lambda b, t: (b, 0, 0)),    # eff_beta  (f32)
            w_spec,                                             # W_out^T
            b_spec,                                             # b_out
        ],
        out_specs=pl.BlockSpec((1, tt, D), lambda b, t: (b, t, 0)),
        compiler_params=pltpu.CompilerParams(
            dimension_semantics=("parallel", "parallel"),
            vmem_limit_bytes=32 * 1024 * 1024),
    )(h, eff_gamma, eff_beta, w_out_t, b_out)
    return out


# --------------------------------------------------------------------------
# Pure-JAX reference for correctness check
# --------------------------------------------------------------------------
def stylization_reference(h, emb, params, eps=1e-5):
    B, T, D = h.shape
    emb = emb.reshape(B, T, D)
    e = emb * jax.nn.sigmoid(emb)                       # SiLU
    emb_out = e @ params["w_emb"].T + params["b_emb"]   # (B, T, 2D)
    emb_out = emb_out[:, 0:1, :]
    scale, shift = emb_out[..., :D], emb_out[..., D:]
    mean = h.mean(-1, keepdims=True)
    var = ((h - mean) ** 2).mean(-1, keepdims=True)
    hn = (h - mean) / jnp.sqrt(var + eps)
    hn = hn * params["gamma"] + params["beta"]
    y = hn * (1.0 + scale) + shift
    z = y * jax.nn.sigmoid(y)                           # SiLU (dropout = no-op)
    return z @ params["w_out"].T + params["b_out"]


if __name__ == "__main__":
    # latent_dim == time_embed_dim == D (required by emb.view(B, T, D))
    B, T, D = 2, 16, 32

    key = jax.random.PRNGKey(0)
    k_h, k_e, k_we, k_be, k_g, k_b, k_wo, k_bo = jax.random.split(key, 8)
    h = jax.random.normal(k_h, (B, T, D), dtype=jnp.float32)
    emb = jax.random.normal(k_e, (B, T, D), dtype=jnp.float32)
    params = {
        # PyTorch nn.Linear weight shape: (out_features, in_features)
        "w_emb": 0.05 * jax.random.normal(k_we, (2 * D, D), dtype=jnp.float32),
        "b_emb": 0.01 * jax.random.normal(k_be, (2 * D,), dtype=jnp.float32),
        "gamma": 1.0 + 0.1 * jax.random.normal(k_g, (D,), dtype=jnp.float32),
        "beta": 0.1 * jax.random.normal(k_b, (D,), dtype=jnp.float32),
        # NOTE: the module zero-initializes this Linear (zero_module); forward
        # semantics are identical for any weights, so we use small random
        # values to make the numerical check meaningful.
        "w_out": 0.02 * jax.random.normal(k_wo, (D, D), dtype=jnp.float32),
        "b_out": 0.01 * jax.random.normal(k_bo, (D,), dtype=jnp.float32),
    }

    # One-time parameter prep (transposes hoisted out of the forward path).
    # On v6e/v7x with bf16 activations, pass mxu_dtype=jnp.bfloat16 here.
    prepped = prepare_params(params, mxu_dtype=None)

    out = jax.block_until_ready(stylization_forward(h, emb, prepped))
    ref = jax.block_until_ready(stylization_reference(h, emb, params))

    assert out.shape == (B, T, D)
    assert jnp.allclose(out, ref, atol=1e-4, rtol=1e-4), "mismatch vs reference"
    print("KERNEL_OK")
</pallas_src>

<mosaic_0001>
module attributes {stable_mosaic.version = 11 : i64} {
  func.func @_fused_kernel(%arg0: i32, %arg1: i32, %arg2: memref<1x8x32xf32, #tpu.memory_space<vmem>>, %arg3: memref<1x1x32xf32, #tpu.memory_space<vmem>>, %arg4: memref<1x1x32xf32, #tpu.memory_space<vmem>>, %arg5: memref<32x32xf32, #tpu.memory_space<vmem>>, %arg6: memref<1x32xf32, #tpu.memory_space<vmem>>, %arg7: memref<1x8x32xf32, #tpu.memory_space<vmem>>) attributes {dimension_semantics = [#tpu.dimension_semantics<parallel>, #tpu.dimension_semantics<parallel>], iteration_bounds = array<i64: 2, 2>, scalar_prefetch = 0 : i64, scratch_operands = 0 : i64, tpu.core_type = #tpu.core_type<tc>, window_params = [{transform_indices = @transform_0, window_bounds = array<i64: 1, 8, 32>}, {transform_indices = @transform_1, window_bounds = array<i64: 1, 1, 32>}, {transform_indices = @transform_2, window_bounds = array<i64: 1, 1, 32>}, {pipeline_mode = #tpu.pipeline_mode<synchronous>, transform_indices = @transform_3, window_bounds = array<i64: 32, 32>}, {pipeline_mode = #tpu.pipeline_mode<synchronous>, transform_indices = @transform_4, window_bounds = array<i64: 1, 32>}, {transform_indices = @transform_5, window_bounds = array<i64: 1, 8, 32>}]} {
    %c0 = arith.constant 0 : index
    %c0_0 = arith.constant 0 : index
    %c0_1 = arith.constant 0 : index
    %0 = vector.load %arg2[%c0, %c0_0, %c0_1] : memref<1x8x32xf32, #tpu.memory_space<vmem>>, vector<1x8x32xf32>
    %1 = vector.shape_cast %0 : vector<1x8x32xf32> to vector<8x32xf32>
    %cst = arith.constant dense<0.000000e+00> : vector<8xf32>
    %2 = vector.multi_reduction <add>, %1, %cst [1] : vector<8x32xf32> to vector<8xf32>
    %3 = vector.shape_cast %2 : vector<8xf32> to vector<8x1xf32>
    %cst_2 = arith.constant 3.200000e+01 : f32
    %4 = vector.broadcast %cst_2 : f32 to vector<8x1xf32>
    %5 = arith.divf %3, %4 : vector<8x1xf32>
    %6 = arith.mulf %1, %1 : vector<8x32xf32>
    %cst_3 = arith.constant dense<0.000000e+00> : vector<8xf32>
    %7 = vector.multi_reduction <add>, %6, %cst_3 [1] : vector<8x32xf32> to vector<8xf32>
    %8 = vector.shape_cast %7 : vector<8xf32> to vector<8x1xf32>
    %cst_4 = arith.constant 3.200000e+01 : f32
    %9 = vector.broadcast %cst_4 : f32 to vector<8x1xf32>
    %10 = arith.divf %8, %9 : vector<8x1xf32>
    %11 = arith.mulf %5, %5 : vector<8x1xf32>
    %12 = arith.subf %10, %11 : vector<8x1xf32>
    %cst_5 = arith.constant 9.99999974E-6 : f32
    %13 = vector.broadcast %cst_5 : f32 to vector<8x1xf32>
    %14 = arith.addf %12, %13 : vector<8x1xf32>
    %15 = math.rsqrt %14 : vector<8x1xf32>
    %16 = vector.broadcast %5 : vector<8x1xf32> to vector<8x32xf32>
    %17 = arith.subf %1, %16 : vector<8x32xf32>
    %18 = vector.broadcast %15 : vector<8x1xf32> to vector<8x32xf32>
    %19 = arith.mulf %17, %18 : vector<8x32xf32>
    %c0_6 = arith.constant 0 : index
    %c0_7 = arith.constant 0 : index
    %c0_8 = arith.constant 0 : index
    %20 = vector.load %arg3[%c0_6, %c0_7, %c0_8] : memref<1x1x32xf32, #tpu.memory_space<vmem>>, vector<1x1x32xf32>
    %21 = vector.shape_cast %20 : vector<1x1x32xf32> to vector<1x32xf32>
    %22 = vector.broadcast %21 : vector<1x32xf32> to vector<8x32xf32>
    %23 = arith.mulf %19, %22 : vector<8x32xf32>
    %c0_9 = arith.constant 0 : index
    %c0_10 = arith.constant 0 : index
    %c0_11 = arith.constant 0 : index
    %24 = vector.load %arg4[%c0_9, %c0_10, %c0_11] : memref<1x1x32xf32, #tpu.memory_space<vmem>>, vector<1x1x32xf32>
    %25 = vector.shape_cast %24 : vector<1x1x32xf32> to vector<1x32xf32>
    %26 = vector.broadcast %25 : vector<1x32xf32> to vector<8x32xf32>
    %27 = arith.addf %23, %26 : vector<8x32xf32>
    %28 = arith.negf %27 : vector<8x32xf32>
    %29 = math.exp %28 : vector<8x32xf32>
    %cst_12 = arith.constant 1.000000e+00 : f32
    %30 = vector.broadcast %cst_12 : f32 to vector<8x32xf32>
    %31 = arith.addf %30, %29 : vector<8x32xf32>
    %32 = arith.divf %30, %31 : vector<8x32xf32>
    %33 = arith.mulf %27, %32 : vector<8x32xf32>
    %c0_13 = arith.constant 0 : index
    %c0_14 = arith.constant 0 : index
    %34 = vector.load %arg5[%c0_13, %c0_14] : memref<32x32xf32, #tpu.memory_space<vmem>>, vector<32x32xf32>
    %cst_15 = arith.constant dense<0.000000e+00> : vector<8x32xf32>
    %35 = tpu.matmul %33, %34, %cst_15 {dimension_numbers = #tpu.dot_dimension_numbers<[1], [0], [0], [1], [0, 0, 1, 1], [], []>} : vector<8x32xf32>, vector<32x32xf32>, vector<8x32xf32> -> vector<8x32xf32>
    %c0_16 = arith.constant 0 : index
    %c0_17 = arith.constant 0 : index
    %36 = vector.load %arg6[%c0_16, %c0_17] : memref<1x32xf32, #tpu.memory_space<vmem>>, vector<1x32xf32>
    %37 = vector.broadcast %36 : vector<1x32xf32> to vector<8x32xf32>
    %38 = arith.addf %35, %37 : vector<8x32xf32>
    %c0_18 = arith.constant 0 : index
    %c0_19 = arith.constant 0 : index
    %c0_20 = arith.constant 0 : index
    %39 = vector.load %arg7[%c0_18, %c0_19, %c0_20] : memref<1x8x32xf32, #tpu.memory_space<vmem>>, vector<1x8x32xf32>
    %40 = vector.shape_cast %39 : vector<1x8x32xf32> to vector<8x32xf32>
    %41 = vector.shape_cast %38 : vector<8x32xf32> to vector<1x8x32xf32>
    tpu.vector_store %arg7[%c0_18, %c0_19, %c0_20], %41 {strides = array<i32>} : memref<1x8x32xf32, #tpu.memory_space<vmem>>, vector<1x8x32xf32>,
    return
  }
  func.func @transform_0(%arg0: i32, %arg1: i32) -> (i32, i32, i32) {
    %c0_i32 = arith.constant 0 : i32
    %c0_i32_0 = arith.constant 0 : i32
    return %arg0, %arg1, %c0_i32 : i32, i32, i32
  }
  func.func @transform_1(%arg0: i32, %arg1: i32) -> (i32, i32, i32) {
    %c0_i32 = arith.constant 0 : i32
    %c0_i32_0 = arith.constant 0 : i32
    %c0_i32_1 = arith.constant 0 : i32
    return %arg0, %c0_i32, %c0_i32_0 : i32, i32, i32
  }
  func.func @transform_2(%arg0: i32, %arg1: i32) -> (i32, i32, i32) {
    %c0_i32 = arith.constant 0 : i32
    %c0_i32_0 = arith.constant 0 : i32
    %c0_i32_1 = arith.constant 0 : i32
    return %arg0, %c0_i32, %c0_i32_0 : i32, i32, i32
  }
  func.func @transform_3(%arg0: i32, %arg1: i32) -> (i32, i32) {
    %c0_i32 = arith.constant 0 : i32
    %c0_i32_0 = arith.constant 0 : i32
    %c0_i32_1 = arith.constant 0 : i32
    return %c0_i32, %c0_i32_0 : i32, i32
  }
  func.func @transform_4(%arg0: i32, %arg1: i32) -> (i32, i32) {
    %c0_i32 = arith.constant 0 : i32
    %c0_i32_0 = arith.constant 0 : i32
    %c0_i32_1 = arith.constant 0 : i32
    return %c0_i32, %c0_i32_0 : i32, i32
  }
  func.func @transform_5(%arg0: i32, %arg1: i32) -> (i32, i32, i32) {
    %c0_i32 = arith.constant 0 : i32
    %c0_i32_0 = arith.constant 0 : i32
    return %arg0, %arg1, %c0_i32 : i32, i32, i32
  }
}

</mosaic_0001>

<llo_original>
// kernel: tpu_custom_call.1
$region0: #{tpu_custom_call.1}
  #allocation0 [shape = 'u32[]', space=smem, size = 0x4, offset = 0x4, fixed_abs, tag = 'smem constant byte address 0x4 - core index']
  #allocation1 [shape = 'u32[72,128]{1,0:T(1,128)}', space=vmem, size = 0x9000, scoped, tag = 'internal scratch']
  %s0 = inlined_call_operand.hbm [shape: f32[2,16,32], index: 0, kind: input, shape index: {}]
  %s1 = inlined_call_operand.hbm [shape: f32[2,1,32], index: 1, kind: input, shape index: {}]
  %s2 = inlined_call_operand.hbm [shape: f32[2,1,32], index: 2, kind: input, shape index: {}]
  %s3 = inlined_call_operand.hbm [shape: f32[32,32], index: 3, kind: input, shape index: {}]
  %s4 = inlined_call_operand.vmem [shape: f32[1,32], index: 4, kind: input, shape index: {}]
  %s5 = inlined_call_operand.hbm [shape: f32[2,16,32], index: 5, kind: output, shape index: {}]
  %s6 = sld [smem:[#allocation0]]
  $region69: #{tpu_custom_call.1} parent=0
    _
  %s8 = ssub.s32 1, %s6
  %s9 = scalar_select 0, %s8, %s6
  $region1: #{tpu_custom_call.1} parent=0
    #allocation2 [shape = 'u8[8192]{0}', space=vmem, size = 0x2000, scoped, tag = 'input window, operand 0']
    #allocation3 [shape = 's32[2]{0}', space=sflag, size = 0x8, scoped, tag = 'scoped memory for tpu_custom_call.1']
    #allocation4 [shape = 's32[2]{0}', space=sflag, size = 0x8, scoped, tag = 'scoped memory for tpu_custom_call.1']
    #allocation5 [shape = 'u8[1024]{0}', space=vmem, size = 0x400, scoped, tag = 'input window, operand 1']
    #allocation6 [shape = 's32[2]{0}', space=sflag, size = 0x8, scoped, tag = 'scoped memory for tpu_custom_call.1']
    #allocation7 [shape = 'u8[1024]{0}', space=vmem, size = 0x400, scoped, tag = 'input window, operand 2']
    #allocation8 [shape = 'u8[16384]{0}', space=vmem, size = 0x4000, scoped, tag = 'input window, operand 3, single buffered']
    #allocation9 [shape = 's32[1]{0}', space=sflag, size = 0x4, scoped, tag = 'scoped memory for tpu_custom_call.1']
    #allocation10 [shape = 'u8[8192]{0}', space=vmem, size = 0x2000, scoped, tag = 'output window, operand 0']
    %10 = vsyncpa [#allocation3], 0
    %s11 = scalar_lea.sflag [#allocation3], 1
    %12 = vsyncpa %s11, 0
    %13 = vsyncpa [#allocation6], 0
    %s14 = scalar_lea.sflag [#allocation6], 1
    %15 = vsyncpa %s14, 0
    %16 = vsyncpa [#allocation9], 0
    %17 = vsyncpa [#allocation4], 0
    %s18 = scalar_lea.sflag [#allocation4], 1
    %19 = vsyncpa %s18, 0
    loop: start=0, step=1, limit=6
    $region2: #{tpu_custom_call.1} parent=1 // loop_pre_header
      _
    $region3: #{tpu_custom_call.1} parent=1 // loop_header
      %s21 = sphi 0, %s25
      %p22 = scmp.ge.s32.totalorder %s21, 6
      %s28 = sphi 0, %s40
      %s29 = sphi 0, %s36
      %s30 = sphi 0, %s28
      %s31 = sphi 0, %s29
      %s32 = sphi 0, %s30
      %s33 = sphi 0, %s31
      %s45 = sphi 0, %s47
      %s48 = sphi 0, %s45
      %s49 = sphi 0, %s48
      %s65 = sphi 0, %s49
      %s71 = sphi 0, %s73
      %s74 = sphi 0, %s71
      %s75 = sphi 0, %s74
      %s91 = sphi 0, %s75
      %s97 = sphi 0, %s99
      %s100 = sphi 0, %s97
      %s101 = sphi 0, %s100
      %s117 = sphi 0, %s101
      %s121 = sphi 0, %s121
      %s123 = sphi 0, %s121
      %s124 = sphi 0, %s123
      %s138 = sphi 0, %s124
      %s142 = sphi 0, %s142
      %s144 = sphi 0, %s142
      %s145 = sphi 0, %s144
      %s159 = sphi 0, %s145
      %s167 = sphi 0, %s169
      %s170 = sphi 0, %s167
      %s171 = sphi 0, %s170
      %s187 = sphi 0, %s171
    $region4: #{tpu_custom_call.1} parent=1 // loop_header_branch
      %24 = sbr.rel (%p22) target = $region8
    $region5: #{tpu_custom_call.1} parent=1 // loop_body
      %s26 = ssub.s32 %s21, 1
      %s27 = ssub.s32 %s21, 2
      %s34 = sadd.s32 1, %s29
      %p35 = scmp.ge.s32.totalorder %s34, 2
      %s36 = scalar_select %p35, 0, %s34
      %s37 = sadd.s32 1, %s28
      %s38 = scalar_select %p35, %s37, %s28
      %p39 = scmp.ge.s32.totalorder %s38, 2
      %s40 = scalar_select %p39, 0, %s38
      %s41 = ssub.s32 %s28, %s40
      %s42 = ssub.s32 %s29, %s36
      %s43 = sor.u32 %s41, %s42
      %p44 = scmp.eq.s32.totalorder %s43, 0
      %s46 = sadd.s32 %s45, 1
      %s47 = scalar_select %p44, %s45, %s46
      %p50 = pneg %p44
      %p51 = scmp.eq.s32.totalorder %s21, 3
      %p52 = por %p50, %p51
      %p53 = scmp.ne.s32.totalorder %s45, %s48
      %p54 = scmp.eq.s32.totalorder %s21, 0
      %p55 = por %p53, %p54
      %p56 = scmp.ne.s32.totalorder %s45, %s48
      %p57 = scmp.eq.s32.totalorder %s26, 3
      %p58 = por %p56, %p57
      %p59 = scmp.ne.s32.totalorder %s48, %s49
      %p60 = scmp.eq.s32.totalorder %s26, 0
      %p61 = por %p59, %p60
      %p62 = scmp.ne.s32.totalorder %s48, %s49
      %p63 = scmp.eq.s32.totalorder %s27, 3
      %p64 = por %p62, %p63
      %p66 = scmp.ne.s32.totalorder %s49, %s65
      %p67 = scmp.eq.s32.totalorder %s27, 0
      %p68 = por %p66, %p67
      %s69 = ssub.s32 %s28, %s40
      %p70 = scmp.eq.s32.totalorder %s69, 0
      %s72 = sadd.s32 %s71, 1
      %s73 = scalar_select %p70, %s71, %s72
      %p76 = pneg %p70
      %p77 = scmp.eq.s32.totalorder %s21, 3
      %p78 = por %p76, %p77
      %p79 = scmp.ne.s32.totalorder %s71, %s74
      %p80 = scmp.eq.s32.totalorder %s21, 0
      %p81 = por %p79, %p80
      %p82 = scmp.ne.s32.totalorder %s71, %s74
      %p83 = scmp.eq.s32.totalorder %s26, 3
      %p84 = por %p82, %p83
      %p85 = scmp.ne.s32.totalorder %s74, %s75
      %p86 = scmp.eq.s32.totalorder %s26, 0
      %p87 = por %p85, %p86
      %p88 = scmp.ne.s32.totalorder %s74, %s75
      %p89 = scmp.eq.s32.totalorder %s27, 3
      %p90 = por %p88, %p89
      %p92 = scmp.ne.s32.totalorder %s75, %s91
      %p93 = scmp.eq.s32.totalorder %s27, 0
      %p94 = por %p92, %p93
      %s95 = ssub.s32 %s28, %s40
      %p96 = scmp.eq.s32.totalorder %s95, 0
      %s98 = sadd.s32 %s97, 1
      %s99 = scalar_select %p96, %s97, %s98
      %p102 = pneg %p96
      %p103 = scmp.eq.s32.totalorder %s21, 3
      %p104 = por %p102, %p103
      %p105 = scmp.ne.s32.totalorder %s97, %s100
      %p106 = scmp.eq.s32.totalorder %s21, 0
      %p107 = por %p105, %p106
      %p108 = scmp.ne.s32.totalorder %s97, %s100
      %p109 = scmp.eq.s32.totalorder %s26, 3
      %p110 = por %p108, %p109
      %p111 = scmp.ne.s32.totalorder %s100, %s101
      %p112 = scmp.eq.s32.totalorder %s26, 0
      %p113 = por %p111, %p112
      %p114 = scmp.ne.s32.totalorder %s100, %s101
      %p115 = scmp.eq.s32.totalorder %s27, 3
      %p116 = por %p114, %p115
      %p118 = scmp.ne.s32.totalorder %s101, %s117
      %p119 = scmp.eq.s32.totalorder %s27, 0
      %p120 = por %p118, %p119
      %s122 = sadd.s32 %s121, 1
      %p125 = scmp.eq.s32.totalorder %s21, 3
      %p126 = scmp.ne.s32.totalorder %s121, %s123
      %p127 = scmp.eq.s32.totalorder %s21, 0
      %p128 = por %p126, %p127
      %p129 = scmp.ne.s32.totalorder %s121, %s123
      %p130 = scmp.eq.s32.totalorder %s26, 3
      %p131 = por %p129, %p130
      %p132 = scmp.ne.s32.totalorder %s123, %s124
      %p133 = scmp.eq.s32.totalorder %s26, 0
      %p134 = por %p132, %p133
      %p135 = scmp.ne.s32.totalorder %s123, %s124
      %p136 = scmp.eq.s32.totalorder %s27, 3
      %p137 = por %p135, %p136
      %p139 = scmp.ne.s32.totalorder %s124, %s138
      %p140 = scmp.eq.s32.totalorder %s27, 0
      %p141 = por %p139, %p140
      %s143 = sadd.s32 %s142, 1
      %p146 = scmp.eq.s32.totalorder %s21, 3
      %p147 = scmp.ne.s32.totalorder %s142, %s144
      %p148 = scmp.eq.s32.totalorder %s21, 0
      %p149 = por %p147, %p148
      %p150 = scmp.ne.s32.totalorder %s142, %s144
      %p151 = scmp.eq.s32.totalorder %s26, 3
      %p152 = por %p150, %p151
      %p153 = scmp.ne.s32.totalorder %s144, %s145
      %p154 = scmp.eq.s32.totalorder %s26, 0
      %p155 = por %p153, %p154
      %p156 = scmp.ne.s32.totalorder %s144, %s145
      %p157 = scmp.eq.s32.totalorder %s27, 3
      %p158 = por %p156, %p157
      %p160 = scmp.ne.s32.totalorder %s145, %s159
      %p161 = scmp.eq.s32.totalorder %s27, 0
      %p162 = por %p160, %p161
      %s163 = ssub.s32 %s28, %s40
      %s164 = ssub.s32 %s29, %s36
      %s165 = sor.u32 %s163, %s164
      %p166 = scmp.eq.s32.totalorder %s165, 0
      %s168 = sadd.s32 %s167, 1
      %s169 = scalar_select %p166, %s167, %s168
      %p172 = pneg %p166
      %p173 = scmp.eq.s32.totalorder %s21, 3
      %p174 = por %p172, %p173
      %p175 = scmp.ne.s32.totalorder %s167, %s170
      %p176 = scmp.eq.s32.totalorder %s21, 0
      %p177 = por %p175, %p176
      %p178 = scmp.ne.s32.totalorder %s167, %s170
      %p179 = scmp.eq.s32.totalorder %s26, 3
      %p180 = por %p178, %p179
      %p181 = scmp.ne.s32.totalorder %s170, %s171
      %p182 = scmp.eq.s32.totalorder %s26, 0
      %p183 = por %p181, %p182
      %p184 = scmp.ne.s32.totalorder %s170, %s171
      %p185 = scmp.eq.s32.totalorder %s27, 3
      %p186 = por %p184, %p185
      %p188 = scmp.ne.s32.totalorder %s171, %s187
      %p189 = scmp.eq.s32.totalorder %s27, 0
      %p190 = por %p188, %p189
      %p191 = scmp.le.s32.totalorder 1, %s21
      %p192 = scmp.lt.s32.totalorder %s21, 5
      %p193 = pnand %p191, %p192
      %p194 = pneg %p193
      // Predicated region
      $region9: #{tpu_custom_call.1} parent=5 // pred_check
        _
      $region10: #{tpu_custom_call.1} parent=5 // pred_check_branch
        %196 = sbr.rel (%p193) target = $region12
      $region11: #{tpu_custom_call.1} parent=5 // pred_region
        %s197 = ssub.s32 %s21, 1
        // Predicated region
        $region13: #{tpu_custom_call.1} parent=11 // pred_check
          %p198 = pneg %p134
        $region14: #{tpu_custom_call.1} parent=11 // pred_check_branch
          %200 = sbr.rel (%p198) target = $region16
        $region15: #{tpu_custom_call.1} parent=11 // pred_region
          %202 = vsyncadd [#allocation9], 0
          %s203 = sshll.u32 %s3, 4
          %s204 = int_to_ptr.hbm [resolvable:$true] %s203
          %s205 = sshll.u32 [#allocation8], 4
          %s206 = int_to_ptr.vmem [resolvable:$true] %s205
          %211 = dma.hbm_to_vmem [thread:$0]  %s204, 512, %s206, [#allocation9], 128, 128, 8
        $region16: #{tpu_custom_call.1} parent=11 // pred_fallthru
          _
        // Predicated region
        $region17: #{tpu_custom_call.1} parent=11 // pred_check
          %p212 = pneg %p155
        $region18: #{tpu_custom_call.1} parent=11 // pred_check_branch
          %214 = sbr.rel (%p212) target = $region20
        $region19: #{tpu_custom_call.1} parent=11 // pred_region
          _
        $region20: #{tpu_custom_call.1} parent=11 // pred_fallthru
          _
      $region12: #{tpu_custom_call.1} parent=5 // pred_fallthru
        _
      %p215 = scmp.lt.s32.totalorder %s21, 4
      // Predicated region
      $region21: #{tpu_custom_call.1} parent=5 // pred_check
        %p216 = pneg %p215
      $region22: #{tpu_custom_call.1} parent=5 // pred_check_branch
        %218 = sbr.rel (%p216) target = $region24
      $region23: #{tpu_custom_call.1} parent=5 // pred_region
        // Predicated region
        $region25: #{tpu_custom_call.1} parent=23 // pred_check
          %p219 = pneg %p55
        $region26: #{tpu_custom_call.1} parent=23 // pred_check_branch
          %221 = sbr.rel (%p219) target = $region28
        $region27: #{tpu_custom_call.1} parent=23 // pred_region
          %s222 = sand.u32 %s45, 1
          %s223 = scalar_lea.sflag [#allocation3], %s222
          %s224 = sand.u32 %s45, 1
          %s225 = smul.addr %s224, 8
          %s226 = scalar_lea.vmem [#allocation2], %s225
          %228 = vsyncadd %s223, 0
          %s229 = smul.addr %s28, 2
          %s230 = sadd.s32 %s29, %s229
          %s231 = smul.addr %s230, 8
          %s232 = scalar_lea.hbm %s0, %s231
          %s234 = sshll.u32 %s232, 4
          %s235 = int_to_ptr.hbm [resolvable:$true] %s234
          %s236 = sshll.u32 %s226, 4
          %s237 = int_to_ptr.vmem [resolvable:$true] %s236
          %239 = dma.hbm_to_vmem [thread:$0]  %s235, 128, %s237, %s223
        $region28: #{tpu_custom_call.1} parent=23 // pred_fallthru
          _
        // Predicated region
        $region29: #{tpu_custom_call.1} parent=23 // pred_check
          %p240 = pneg %p81
        $region30: #{tpu_custom_call.1} parent=23 // pred_check_branch
          %242 = sbr.rel (%p240) target = $region32
        $region31: #{tpu_custom_call.1} parent=23 // pred_region
          %s243 = sand.u32 %s21, 1
          %s244 = scalar_lea.sflag [#allocation6], %s243
          %s245 = sand.u32 %s71, 1
          %s246 = scalar_lea.vmem [#allocation5], %s245
          %248 = vsyncadd %s244, 0
          %s249 = scalar_lea.hbm %s1, %s28
          %s251 = sshll.u32 %s249, 4
          %s252 = int_to_ptr.hbm [resolvable:$true] %s251
          %s253 = sshll.u32 %s246, 4
          %s254 = int_to_ptr.vmem [resolvable:$true] %s253
          %256 = dma.hbm_to_vmem [thread:$0]  %s252, 16, %s254, %s244
        $region32: #{tpu_custom_call.1} parent=23 // pred_fallthru
          _
        // Predicated region
        $region33: #{tpu_custom_call.1} parent=23 // pred_check
          %p257 = pneg %p107
        $region34: #{tpu_custom_call.1} parent=23 // pred_check_branch
          %259 = sbr.rel (%p257) target = $region36
        $region35: #{tpu_custom_call.1} parent=23 // pred_region
          %s260 = sand.u32 %s21, 1
          %s261 = scalar_lea.sflag [#allocation6], %s260
          %s262 = sand.u32 %s97, 1
          %s263 = scalar_lea.vmem [#allocation7], %s262
          %265 = vsyncadd %s261, 0
          %s266 = scalar_lea.hbm %s2, %s28
          %s268 = sshll.u32 %s266, 4
          %s269 = int_to_ptr.hbm [resolvable:$true] %s268
          %s270 = sshll.u32 %s263, 4
          %s271 = int_to_ptr.vmem [resolvable:$true] %s270
          %273 = dma.hbm_to_vmem [thread:$0]  %s269, 16, %s271, %s261
        $region36: #{tpu_custom_call.1} parent=23 // pred_fallthru
          _
      $region24: #{tpu_custom_call.1} parent=5 // pred_fallthru
        _
      %p274 = scmp.le.s32.totalorder 1, %s21
      %p275 = scmp.lt.s32.totalorder %s21, 5
      %p276 = pnand %p274, %p275
      %p277 = pneg %p276
      // Predicated region
      $region37: #{tpu_custom_call.1} parent=5 // pred_check
        _
      $region38: #{tpu_custom_call.1} parent=5 // pred_check_branch
        %279 = sbr.rel (%p276) target = $region40
      $region39: #{tpu_custom_call.1} parent=5 // pred_region
        %s280 = ssub.s32 %s21, 1
        %s281 = sand.u32 %s48, 1
        %s282 = scalar_lea.sflag [#allocation3], %s281
        %s283 = sand.u32 %s48, 1
        %s284 = smul.addr %s283, 8
        %s285 = scalar_lea.vmem [#allocation2], %s284
        // Predicated region
        $region41: #{tpu_custom_call.1} parent=39 // pred_check
          %p286 = pneg %p61
        $region42: #{tpu_custom_call.1} parent=39 // pred_check_branch
          %288 = sbr.rel (%p286) target = $region44
        $region43: #{tpu_custom_call.1} parent=39 // pred_region
          %290 = dma.done %s282, 128
        $region44: #{tpu_custom_call.1} parent=39 // pred_fallthru
          _
        %s291 = sand.u32 %s26, 1
        %s292 = scalar_lea.sflag [#allocation6], %s291
        %s293 = sand.u32 %s74, 1
        %s294 = scalar_lea.vmem [#allocation5], %s293
        // Predicated region
        $region45: #{tpu_custom_call.1} parent=39 // pred_check
          %p295 = pneg %p87
        $region46: #{tpu_custom_call.1} parent=39 // pred_check_branch
          %297 = sbr.rel (%p295) target = $region48
        $region47: #{tpu_custom_call.1} parent=39 // pred_region
          %299 = dma.done %s292, 16
        $region48: #{tpu_custom_call.1} parent=39 // pred_fallthru
          _
        %s300 = sand.u32 %s26, 1
        %s301 = scalar_lea.sflag [#allocation6], %s300
        %s302 = sand.u32 %s100, 1
        %s303 = scalar_lea.vmem [#allocation7], %s302
        // Predicated region
        $region49: #{tpu_custom_call.1} parent=39 // pred_check
          %p304 = pneg %p113
        $region50: #{tpu_custom_call.1} parent=39 // pred_check_branch
          %306 = sbr.rel (%p304) target = $region52
        $region51: #{tpu_custom_call.1} parent=39 // pred_region
          %308 = dma.done %s301, 16
        $region52: #{tpu_custom_call.1} parent=39 // pred_fallthru
          _
        // Predicated region
        $region53: #{tpu_custom_call.1} parent=39 // pred_check
          %p309 = pneg %p134
        $region54: #{tpu_custom_call.1} parent=39 // pred_check_branch
          %311 = sbr.rel (%p309) target = $region56
        $region55: #{tpu_custom_call.1} parent=39 // pred_region
          %313 = dma.done [#allocation9], 512
        $region56: #{tpu_custom_call.1} parent=39 // pred_fallthru
          _
        %s314 = sand.u32 %s48, 1
        %s315 = scalar_lea.sflag [#allocation3], %s314
        %s316 = sand.u32 %s48, 1
        %s317 = smul.addr %s316, 8
        %s318 = scalar_lea.vmem [#allocation2], %s317
        %p319 = pneg %p61
        %p320 = pneg %p58
        %s321 = sand.u32 %s26, 1
        %s322 = scalar_lea.sflag [#allocation6], %s321
        %s323 = sand.u32 %s74, 1
        %s324 = scalar_lea.vmem [#allocation5], %s323
        %p325 = pneg %p87
        %p326 = pneg %p84
        %s327 = sand.u32 %s26, 1
        %s328 = scalar_lea.sflag [#allocation6], %s327
        %s329 = sand.u32 %s100, 1
        %s330 = scalar_lea.vmem [#allocation7], %s329
        %p331 = pneg %p113
        %p332 = pneg %p110
        %p333 = pneg %p134
        %p334 = pneg %p131
        %p335 = pneg %p155
        %p336 = pneg %p152
        %p337 = pneg %p183
        %p338 = pneg %p180
        %s339 = sand.u32 %s170, 1
        %s340 = scalar_lea.sflag [#allocation4], %s339
        %s341 = sand.u32 %s170, 1
        %s342 = smul.addr %s341, 8
        %s343 = scalar_lea.vmem [#allocation10], %s342
        %v344 = vld [vmem:[%s285] sm:$0xff]
        %vm345 = vcmask 261120
        %v346 = vsel %vm345, %v344, 0.0
        %347 = vadd.xlane.f32.xlu0 %v346
        %v348 = vpop.xlane.xlu0 %347
        %v349 = vrcp.pop 32.0
        %v350 = vmul.f32 32.0, %v349
        %v351 = vsub.f32 1.0, %v350
        %v352 = vmul.f32 %v349, %v351
        %v353 = vadd.f32 %v349, %v352
        %vm354 = vweird.f32 %v349
        %v355 = vsel %vm354, %v349, %v353
        %v356 = vmul.f32 %v348, %v355
        %v357 = vmul.f32 %v344, %v344
        %v358 = vsel %vm345, %v357, 0.0
        %359 = vadd.xlane.f32.xlu0 %v358
        %v360 = vpop.xlane.xlu0 %359
        %v361 = vmul.f32 %v360, %v355
        %v362 = vmul.f32 %v356, %v356
        %v363 = vsub.f32 %v361, %v362
        %v364 = vadd.f32 %v363, 1e-05
        %v365 = vrsqrt.pop %v364
        %v366 = vmul.f32 %v365, %v364
        %v367 = vmul.f32 %v366, %v365
        %v368 = vmul.f32 0.5, %v367
        %v369 = vsub.f32 1.5, %v368
        %v370 = vmul.f32 %v365, %v369
        %vm371 = vweird.f32 %v364
        %vm372 = vweird.f32 %v365
        %vm373 = vmor %vm371, %vm372
        %v374 = vsel %vm373, %v365, %v370
        %v375 = vsub.f32 %v344, %v356
        %v376 = vmul.f32 %v375, %v374
        %v377 = vld [vmem:[%s294] sm:$0x1]
        %v379 = vperm.slane %v377, 0
        %v381 = vmul.f32 %v376, %v379
        %v382 = vld [vmem:[%s303] sm:$0x1]
        %v384 = vperm.slane %v382, 0
        %v386 = vadd.f32 %v381, %v384
        %v387 = vxor.u32 %v386, 2147483648
        %v388 = vmul.f32 %v387, 1.442695
        %v389 = vpow.pop %v388
        %v390 = vadd.f32 %v389, 1.0
        %v391 = vrcp.pop %v390
        %v392 = vmul.f32 %v390, %v391
        %v393 = vsub.f32 1.0, %v392
        %v394 = vmul.f32 %v391, %v393
        %v395 = vadd.f32 %v391, %v394
        %vm396 = vweird.f32 %v390
        %vm397 = vweird.f32 %v391
        %vm398 = vmor %vm396, %vm397
        %v399 = vsel %vm398, %v391, %v395
        %v400 = vand.u32 2147483647, %v390
        %vm401 = vcmp.eq.f32.partialorder %v400, 8.507059e+37
        %v402 = vand.u32 %v390, 2147483648
        %v403 = vor.u32 1.1754944e-38, %v402
        %v404 = vsel %vm401, %v403, %v399
        %v405 = vmul.f32 1.0, %v404
        %v406 = vmul.f32 %v386, %v405
        %v407 = vld [vmem:[#allocation8] sm:$0xff]
        %v408 = vld [vmem:[#allocation8 + $0x8] sm:$0xff]
        %v409 = vld [vmem:[#allocation8 + $0x10] sm:$0xff]
        %v410 = vld [vmem:[#allocation8 + $0x18] sm:$0xff]
        %v411 = vld [vmem:[%s4] sm:$0x1]
        %v413 = vperm.slane %v411, 0
        %v416 = vsel %vm345, %v406, 0
        %418 = vmatpush.msra.mxu0 0.0
        %419 = vmatpush.msra.mxu0 0.0
        %420 = vmatpush.msra.mxu0 0.0
        %421 = vmatpush.msra.mxu0 0.0
        %422 = vmatpush.msra.mxu0 0.0
        %423 = vmatpush.msra.mxu0 0.0
        %424 = vmatpush.msra.mxu0 0.0
        %425 = vmatpush.msra.mxu0 0.0
        %426 = vmatpush.msra.mxu0 0.0
        %427 = vmatpush.msra.mxu0 0.0
        %428 = vmatpush.msra.mxu0 0.0
        %429 = vmatpush.msra.mxu0 0.0
        %430 = vmatpush.msra.mxu0 %v410
        %431 = vmatpush.msra.mxu0 %v409
        %432 = vmatpush.msra.mxu0 %v408
        %433 = vmatpush.msra.mxu0 %v407
        %434 = vmatmul.f32.gmra.mxu0 %v416
        %v435 = vpop.f32.mrf.mxu0
        %v436 = vadd.f32 %v413, %v435
        %437 = vdwg.mxu0
        %438 = vst.msk [vmem:[%s343] sm:$0xff] %vm345, %v436
        %s439 = sand.u32 %s170, 1
        %s440 = scalar_lea.sflag [#allocation4], %s439
        %s441 = sand.u32 %s170, 1
        %s442 = smul.addr %s441, 8
        %s443 = scalar_lea.vmem [#allocation10], %s442
        // Predicated region
        $region57: #{tpu_custom_call.1} parent=39 // pred_check
          %p444 = pneg %p180
        $region58: #{tpu_custom_call.1} parent=39 // pred_check_branch
          %446 = sbr.rel (%p444) target = $region60
        $region59: #{tpu_custom_call.1} parent=39 // pred_region
          %448 = vsyncadd %s440, 0
          %s449 = smul.addr %s30, 2
          %s450 = sadd.s32 %s31, %s449
          %s451 = smul.addr %s450, 8
          %s452 = scalar_lea.hbm %s5, %s451
          %s454 = sshll.u32 %s443, 4
          %s455 = int_to_ptr.vmem [resolvable:$true] %s454
          %s456 = sshll.u32 %s452, 4
          %s457 = int_to_ptr.hbm [resolvable:$true] %s456
          %459 = dma.vmem_to_hbm [thread:$0]  %s455, 128, %s457, %s440
        $region60: #{tpu_custom_call.1} parent=39 // pred_fallthru
          _
      $region40: #{tpu_custom_call.1} parent=5 // pred_fallthru
        _
      %p460 = scmp.le.s32.totalorder 2, %s21
      // Predicated region
      $region61: #{tpu_custom_call.1} parent=5 // pred_check
        %p461 = pneg %p460
      $region62: #{tpu_custom_call.1} parent=5 // pred_check_branch
        %463 = sbr.rel (%p461) target = $region64
      $region63: #{tpu_custom_call.1} parent=5 // pred_region
        %s464 = ssub.s32 %s21, 2
        // Predicated region
        $region65: #{tpu_custom_call.1} parent=63 // pred_check
          %p465 = pneg %p186
        $region66: #{tpu_custom_call.1} parent=63 // pred_check_branch
          %467 = sbr.rel (%p465) target = $region68
        $region67: #{tpu_custom_call.1} parent=63 // pred_region
          %s468 = sand.u32 %s171, 1
          %s469 = scalar_lea.sflag [#allocation4], %s468
          %s470 = sand.u32 %s171, 1
          %s471 = smul.addr %s470, 8
          %s472 = scalar_lea.vmem [#allocation10], %s471
          %474 = dma.done %s469, 128
        $region68: #{tpu_custom_call.1} parent=63 // pred_fallthru
          _
      $region64: #{tpu_custom_call.1} parent=5 // pred_fallthru
        _
    $region6: #{tpu_custom_call.1} parent=1 // loop_footer
      %s25 = sadd.s32 1, %s21
    $region7: #{tpu_custom_call.1} parent=1 // loop_footer_branch
      %20 = sbr.rel target = $region3
    $region8: #{tpu_custom_call.1} parent=1 // loop_exit
      _
    %475 = vsyncpa [#allocation3], 1
    %s476 = scalar_lea.sflag [#allocation3], 1
    %477 = vsyncpa %s476, 1
    %478 = vsyncpa [#allocation6], 1
    %s479 = scalar_lea.sflag [#allocation6], 1
    %480 = vsyncpa %s479, 1
    %481 = vsyncpa [#allocation9], 1
    %482 = vsyncpa [#allocation4], 1
    %s483 = scalar_lea.sflag [#allocation4], 1
    %484 = vsyncpa %s483, 1

</llo_original>
